<compile_context>
chip_gen: v7x
topology: tpu7x:2x2x1
jax: 0.10.0
libtpu: 0.0.40
codegen_flags: <defaults>
</compile_context>

<pallas_src>
import jax
import jax.numpy as jnp
from jax.experimental import pallas as pl
from jax.experimental.pallas import tpu as pltpu


LANES = 128                       # lane-dense output slab width
VMEM_LIMIT = 48 * 1024 * 1024     # conservative (<= v7x physical); ~96 MiB OK on v5e/v6e


def _choose_tile_f(F):
    # 512 divides the production flattened-feature count (25088 = 49*512); prefer it.
    for t in (512, 256, 128):
        if F % t == 0:
            return t
    raise ValueError(f"flattened feature dim {F} must be a multiple of 128")


def _streamed_spec(block_shape, index_map, nbuf):
    """BlockSpec with deeper pipelining when supported; plain double-buffered otherwise."""
    try:
        return pl.BlockSpec(block_shape, index_map, pipeline_mode=pl.Buffered(nbuf))
    except (TypeError, AttributeError):
        return pl.BlockSpec(block_shape, index_map)


def _pad_rows(x, mult=8):
    m = x.shape[0]
    m_pad = max(mult, ((m + mult - 1) // mult) * mult)
    if m_pad != m:
        x = jnp.pad(x, ((0, m_pad - m), (0, 0)))
    return x


def _start_w2_prefetch(w2_hbm, w2_vmem, w2_sem):
    pltpu.make_async_copy(w2_hbm, w2_vmem, w2_sem.at[0]).start()


def _wait_w2_prefetch(w2_hbm, w2_vmem, w2_sem):
    pltpu.make_async_copy(w2_hbm, w2_vmem, w2_sem.at[0]).wait()


# ----------------------------------------------------------------------------
# Kernel 1: Img2Vec embedding (flatten -> Linear -> ReLU -> Linear), batched.
# Grid: (F // TILE_F,) reduction over flattened features; f32 VMEM accumulator.
# w2 stays in HBM and is prefetched under the reduction loop.
# ----------------------------------------------------------------------------
def embed_kernel(x_ref, w1_ref, b1_ref, w2_hbm, b2_ref, out_ref,
                 acc_ref, w2_vmem, w2_sem):
    k = pl.program_id(0)

    @pl.when(k == 0)
    def _init():
        acc_ref[...] = jnp.zeros_like(acc_ref)
        _start_w2_prefetch(w2_hbm, w2_vmem, w2_sem)

    # bf16 x bf16 -> f32 accumulate on the MXU
    acc_ref[...] += jnp.dot(x_ref[...], w1_ref[...],
                            preferred_element_type=jnp.float32)

    @pl.when(k == pl.num_programs(0) - 1)
    def _finalize():
        _wait_w2_prefetch(w2_hbm, w2_vmem, w2_sem)
        h = jnp.maximum(acc_ref[...] + b1_ref[...], 0.0)              # (M, HID) f32
        out_ref[...] = jnp.dot(h.astype(jnp.bfloat16), w2_vmem[...],
                               preferred_element_type=jnp.float32) + b2_ref[...]


def img2vec_embed(x_flat_bf16, w1, b1, w2, b2):
    """x_flat_bf16: (M, F) bf16 (M multiple of 8) -> embeddings (M, D) f32."""
    M, F = x_flat_bf16.shape
    HID = w1.shape[1]
    D = w2.shape[1]
    tile_f = _choose_tile_f(F)
    nk = F // tile_f
    nbuf = max(2, min(3, nk))
    grid_spec = pltpu.PrefetchScalarGridSpec(
        num_scalar_prefetch=0,
        grid=(nk,),
        in_specs=[
            _streamed_spec((M, tile_f), lambda k: (0, k), nbuf),     # activations (stream over F)
            _streamed_spec((tile_f, HID), lambda k: (k, 0), nbuf),   # w1 tile (stream over F)
            pl.BlockSpec((1, HID), lambda k: (0, 0)),                # b1 (resident)
            pl.BlockSpec(memory_space=pl.ANY),                       # w2 (HBM, manual prefetch)
            pl.BlockSpec((1, D), lambda k: (0, 0)),                  # b2 (resident)
        ],
        out_specs=pl.BlockSpec((M, D), lambda k: (0, 0)),
        scratch_shapes=[
            pltpu.VMEM((M, HID), jnp.float32),                       # GEMM1 accumulator
            pltpu.VMEM((HID, D), jnp.bfloat16),                      # staged w2
            pltpu.SemaphoreType.DMA((1,)),                           # w2 prefetch semaphore
        ],
    )
    return pl.pallas_call(
        embed_kernel,
        out_shape=jax.ShapeDtypeStruct((M, D), jnp.float32),
        grid_spec=grid_spec,
        compiler_params=pltpu.CompilerParams(
            dimension_semantics=("arbitrary",),
            vmem_limit_bytes=VMEM_LIMIT),
    )(x_flat_bf16, w1, b1, w2, b2)


# ----------------------------------------------------------------------------
# Kernel 2 (fused LR path): embedding + cosine similarity + selection.
#   sims[m, k] = <emb_m, r_k> / sqrt(max(||emb_m||^2 * ||r_k||^2, eps^2))   (torch eps)
#   sel[m]     = first argmax_k sims[m, k]  if max > 0  else  -1
# References arrive pre-transposed (D, K_MAX) bf16 with precomputed squared norms;
# padded (all-zero) columns get sims == 0 and can never win the strict ">".
# ----------------------------------------------------------------------------
def fused_embed_select_kernel(x_ref, w1_ref, b1_ref, w2_hbm, b2_ref,
                              ref_t_ref, ref_n2_ref,
                              sel_ref, sim_ref,
                              acc_ref, w2_vmem, w2_sem):
    k = pl.program_id(0)

    @pl.when(k == 0)
    def _init():
        acc_ref[...] = jnp.zeros_like(acc_ref)
        _start_w2_prefetch(w2_hbm, w2_vmem, w2_sem)

    acc_ref[...] += jnp.dot(x_ref[...], w1_ref[...],
                            preferred_element_type=jnp.float32)

    @pl.when(k == pl.num_programs(0) - 1)
    def _finalize():
        _wait_w2_prefetch(w2_hbm, w2_vmem, w2_sem)
        eps = 1e-8
        h = jnp.maximum(acc_ref[...] + b1_ref[...], 0.0)                 # (M, HID) f32
        emb = jnp.dot(h.astype(jnp.bfloat16), w2_vmem[...],
                      preferred_element_type=jnp.float32) + b2_ref[...]  # (M, D) f32

        # cosine similarity: bf16 MXU dot against pre-transposed refs, rsqrt on the EUP
        dots = jnp.dot(emb.astype(jnp.bfloat16), ref_t_ref[...],
                       preferred_element_type=jnp.float32)               # (M, K)
        nx2 = jnp.sum(emb * emb, axis=-1, keepdims=True)                 # (M, 1)
        inv = jax.lax.rsqrt(jnp.maximum(nx2 * ref_n2_ref[...], eps * eps))
        sims = dots * inv                                                # (M, K)

        # strict-">" maximum, first-occurrence tie-break (insertion order)
        max_val = jnp.max(sims, axis=-1, keepdims=True)                  # (M, 1)
        kidx = jax.lax.broadcasted_iota(jnp.int32, sims.shape, 1)
        n_ref = sims.shape[1]
        first = jnp.min(jnp.where(sims == max_val, kidx, n_ref),
                        axis=-1, keepdims=True)                          # (M, 1)
        sel = jnp.where(max_val > 0.0, first, -1).astype(jnp.int32)

        # lane-dense (M, 128) output slabs -> unmasked stores
        sel_ref[...] = jnp.broadcast_to(sel, sel_ref.shape)
        sim_ref[...] = jnp.broadcast_to(
            jnp.where(max_val > 0.0, max_val, 0.0), sim_ref.shape)


def embed_and_select(x_flat_bf16, w1, b1, w2, b2, ref_t, ref_n2):
    """Fused LR path.  Returns (sel (M,128) int32, max_sim (M,128) f32); column 0 is the value."""
    M, F = x_flat_bf16.shape
    HID = w1.shape[1]
    D = w2.shape[1]
    tile_f = _choose_tile_f(F)
    nk = F // tile_f
    nbuf = max(2, min(3, nk))
    grid_spec = pltpu.PrefetchScalarGridSpec(
        num_scalar_prefetch=0,
        grid=(nk,),
        in_specs=[
            _streamed_spec((M, tile_f), lambda k: (0, k), nbuf),
            _streamed_spec((tile_f, HID), lambda k: (k, 0), nbuf),
            pl.BlockSpec((1, HID), lambda k: (0, 0)),
            pl.BlockSpec(memory_space=pl.ANY),                       # w2 (HBM, manual prefetch)
            pl.BlockSpec((1, D), lambda k: (0, 0)),
            pl.BlockSpec(ref_t.shape, lambda k: (0, 0)),             # refs^T (resident, bf16)
            pl.BlockSpec(ref_n2.shape, lambda k: (0, 0)),            # ref squared norms (resident)
        ],
        out_specs=(
            pl.BlockSpec((M, LANES), lambda k: (0, 0)),
            pl.BlockSpec((M, LANES), lambda k: (0, 0)),
        ),
        scratch_shapes=[
            pltpu.VMEM((M, HID), jnp.float32),
            pltpu.VMEM((HID, D), jnp.bfloat16),
            pltpu.SemaphoreType.DMA((1,)),
        ],
    )
    return pl.pallas_call(
        fused_embed_select_kernel,
        out_shape=(jax.ShapeDtypeStruct((M, LANES), jnp.int32),
                   jax.ShapeDtypeStruct((M, LANES), jnp.float32)),
        grid_spec=grid_spec,
        compiler_params=pltpu.CompilerParams(
            dimension_semantics=("arbitrary",),
            vmem_limit_bytes=VMEM_LIMIT),
    )(x_flat_bf16, w1, b1, w2, b2, ref_t, ref_n2)


# ----------------------------------------------------------------------------
# End-to-end jitted forward: flatten + pad + fused kernel + sel->id resolution.
# ----------------------------------------------------------------------------
@jax.jit
def _forward_impl(lr_feats, w1, b1, w2, b2, ref_t, ref_n2, ref_ids):
    B = lr_feats.shape[0]
    x = _pad_rows(lr_feats.reshape(B, -1).astype(jnp.bfloat16))
    sel, sim = embed_and_select(x, w1, b1, w2, b2, ref_t, ref_n2)
    sel0 = sel[:B, 0]
    kmax = ref_ids.shape[0]
    # sel == -1 (no similarity strictly > 0) -> id 0, matching the PyTorch default.
    ids = jnp.where(sel0 >= 0, jnp.take(ref_ids, jnp.clip(sel0, 0, kmax - 1)), 0)
    return ids, sim[:B, 0]


# ----------------------------------------------------------------------------
# RefSelector (JAX/Pallas version)
# ----------------------------------------------------------------------------
class RefSelectorPallas:
    def __init__(self, in_features, hidden, emb_dim, max_refs, key):
        k1, k2, k3, k4 = jax.random.split(key, 4)
        s1 = 1.0 / jnp.sqrt(in_features)
        s2 = 1.0 / jnp.sqrt(hidden)
        # deterministic synthetic "VGG classifier" weights, stored bf16 (f32 accumulation)
        self.w1 = jax.random.uniform(k1, (in_features, hidden), jnp.float32,
                                     -s1, s1).astype(jnp.bfloat16)
        self.b1 = jax.random.uniform(k2, (1, hidden), jnp.float32, -s1, s1)
        self.w2 = jax.random.uniform(k3, (hidden, emb_dim), jnp.float32,
                                     -s2, s2).astype(jnp.bfloat16)
        self.b2 = jax.random.uniform(k4, (1, emb_dim), jnp.float32, -s2, s2)
        # persistent, fixed-size, zero-padded reference state (compile-stable K):
        # pre-transposed bf16 refs + precomputed squared norms + device-resident ids
        self.max_refs = max_refs
        self.num_refs = 0
        self.ref_t = jnp.zeros((emb_dim, max_refs), jnp.bfloat16)
        self.ref_n2 = jnp.zeros((1, max_refs), jnp.float32)
        self.ref_id_arr = jnp.zeros((max_refs,), jnp.int32)
        self.ref_ids = []   # host copy, insertion order == dict key order in PyTorch

    def update_ref_vectors(self, ref_feats_nchw, ref_ids):
        """Register a batch of reference feature maps in ONE embed call (cold path)."""
        start = self.num_refs
        k_new = len(ref_ids)
        assert start + k_new <= self.max_refs
        x = ref_feats_nchw.reshape(k_new, -1).astype(jnp.bfloat16)
        vecs = img2vec_embed(_pad_rows(x), self.w1, self.b1,
                             self.w2, self.b2)[:k_new]            # (k_new, D) f32
        self.ref_t = self.ref_t.at[:, start:start + k_new].set(
            vecs.T.astype(jnp.bfloat16))
        self.ref_n2 = self.ref_n2.at[0, start:start + k_new].set(
            jnp.sum(vecs * vecs, axis=-1))
        self.ref_id_arr = self.ref_id_arr.at[start:start + k_new].set(
            jnp.asarray(ref_ids, jnp.int32))
        self.ref_ids.extend(ref_ids)
        self.num_refs += k_new

    def forward(self, lr_feats_nchw):
        ids, _ = _forward_impl(lr_feats_nchw, self.w1, self.b1, self.w2, self.b2,
                               self.ref_t, self.ref_n2, self.ref_id_arr)
        ids = jax.device_get(jax.block_until_ready(ids))
        return [int(i) for i in ids]


if __name__ == "__main__":
    key = jax.random.PRNGKey(0)
    kp, klr, kref = jax.random.split(key, 3)

    # small synthetic shapes (stand-ins for the LTE feature maps)
    B, C, Hh, Ww = 2, 4, 16, 16        # LR batch, NCHW
    F = C * Hh * Ww                    # 1024 flattened features -> TILE_F=512, 2 steps
    HID, D = 256, 256                  # classifier hidden / embedding dim (lane multiples)
    K = 4                              # registered reference images
    K_MAX = 8                          # padded reference-buffer capacity

    selector = RefSelectorPallas(F, HID, D, K_MAX, kp)

    # register reference vectors with ONE batched embed call
    ref_feats = jax.random.normal(kref, (K, C, Hh, Ww), jnp.float32)
    ref_id_list = [10, 20, 30, 40]
    selector.update_ref_vectors(ref_feats, ref_id_list)
    jax.block_until_ready(selector.ref_t)

    # forward pass on LR batch (single fused embed + cosine + select kernel, one jit)
    lr_feats = jax.random.normal(klr, (B, C, Hh, Ww), jnp.float32)
    max_sim_ids = selector.forward(lr_feats)

    # ---- sanity check against a plain-JAX reference of the PyTorch semantics ----
    def ref_embed(feat):
        x = feat.reshape(feat.shape[0], -1).astype(jnp.bfloat16).astype(jnp.float32)
        h = jnp.maximum(x @ selector.w1.astype(jnp.float32) + selector.b1, 0.0)
        h = h.astype(jnp.bfloat16).astype(jnp.float32)
        return h @ selector.w2.astype(jnp.float32) + selector.b2

    lv = ref_embed(lr_feats)           # (B, D)
    rv = ref_embed(ref_feats)          # (K, D)
    eps = 1e-8
    w12 = lv @ rv.T
    n12 = jnp.sqrt(jnp.maximum(
        jnp.sum(lv * lv, axis=-1, keepdims=True) * jnp.sum(rv * rv, axis=-1)[None, :],
        eps * eps))
    sims = w12 / n12
    expected = []
    for b in range(B):
        best_id, best_val = 0, 0.0
        for k in range(K):
            v = float(sims[b, k])
            if v > best_val:
                best_id, best_val = ref_id_list[k], v
        expected.append(best_id)
    assert max_sim_ids == expected, (max_sim_ids, expected)

    print("KERNEL_OK")
</pallas_src>

<mosaic_0001>
module attributes {stable_mosaic.version = 11 : i64} {
  func.func @embed_kernel(%arg0: i32, %arg1: memref<8x512xbf16, #tpu.memory_space<vmem>>, %arg2: memref<512x256xbf16, #tpu.memory_space<vmem>>, %arg3: memref<1x256xf32, #tpu.memory_space<vmem>>, %arg4: memref<256x256xbf16, #tpu.memory_space<any>>, %arg5: memref<1x256xf32, #tpu.memory_space<vmem>>, %arg6: memref<8x256xf32, #tpu.memory_space<vmem>>, %arg7: memref<8x256xf32, #tpu.memory_space<vmem>>, %arg8: memref<256x256xbf16, #tpu.memory_space<vmem>>, %arg9: memref<1x!tpu.dma_semaphore, #tpu.memory_space<semaphore_mem>>) attributes {dimension_semantics = [#tpu.dimension_semantics<arbitrary>], iteration_bounds = array<i64: 2>, scalar_prefetch = 0 : i64, scratch_operands = 3 : i64, tpu.core_type = #tpu.core_type<tc>, window_params = [{pipeline_mode = #tpu.pipeline_mode<double_buffered>, transform_indices = @transform_0, window_bounds = array<i64: 8, 512>}, {pipeline_mode = #tpu.pipeline_mode<double_buffered>, transform_indices = @transform_1, window_bounds = array<i64: 512, 256>}, {pipeline_mode = #tpu.pipeline_mode<synchronous>, transform_indices = @transform_2, window_bounds = array<i64: 1, 256>}, {}, {pipeline_mode = #tpu.pipeline_mode<synchronous>, transform_indices = @transform_4, window_bounds = array<i64: 1, 256>}, {pipeline_mode = #tpu.pipeline_mode<synchronous>, transform_indices = @transform_5, window_bounds = array<i64: 8, 256>}]} {
    %c0_i32 = arith.constant 0 : i32
    %0 = arith.cmpi eq, %arg0, %c0_i32 : i32
    %1 = arith.extui %0 : i1 to i32
    %c0_i32_0 = arith.constant 0 : i32
    %2 = arith.cmpi ne, %1, %c0_i32_0 : i32
    scf.if %2 {
      %cst_9 = arith.constant 0.000000e+00 : f32
      %12 = vector.broadcast %cst_9 : f32 to vector<8x256xf32>
      %c0_10 = arith.constant 0 : index
      %c0_11 = arith.constant 0 : index
      %13 = vector.load %arg7[%c0_10, %c0_11] : memref<8x256xf32, #tpu.memory_space<vmem>>, vector<8x256xf32>
      tpu.vector_store %arg7[%c0_10, %c0_11], %12 {strides = array<i32>} : memref<8x256xf32, #tpu.memory_space<vmem>>, vector<8x256xf32>,
      %c0_i32_12 = arith.constant 0 : i32
      %14 = tpu.memref_slice %arg9[%c0_i32_12] : memref<1x!tpu.dma_semaphore, #tpu.memory_space<semaphore_mem>> -> memref<1x!tpu.dma_semaphore, #tpu.memory_space<semaphore_mem>>
      %15 = tpu.memref_squeeze %14 : memref<1x!tpu.dma_semaphore, #tpu.memory_space<semaphore_mem>> -> memref<!tpu.dma_semaphore, #tpu.memory_space<semaphore_mem>>
      tpu.enqueue_dma source(%arg4 : memref<256x256xbf16, #tpu.memory_space<any>>) target(%arg8 : memref<256x256xbf16, #tpu.memory_space<vmem>>) target_semaphore(%15 : memref<!tpu.dma_semaphore, #tpu.memory_space<semaphore_mem>>)
    } else {
    }
    %c0 = arith.constant 0 : index
    %c0_1 = arith.constant 0 : index
    %3 = vector.load %arg7[%c0, %c0_1] : memref<8x256xf32, #tpu.memory_space<vmem>>, vector<8x256xf32>
    %c0_2 = arith.constant 0 : index
    %c0_3 = arith.constant 0 : index
    %4 = vector.load %arg1[%c0_2, %c0_3] : memref<8x512xbf16, #tpu.memory_space<vmem>>, vector<8x512xbf16>
    %c0_4 = arith.constant 0 : index
    %c0_5 = arith.constant 0 : index
    %5 = vector.load %arg2[%c0_4, %c0_5] : memref<512x256xbf16, #tpu.memory_space<vmem>>, vector<512x256xbf16>
    %cst = arith.constant dense<0.000000e+00> : vector<8x256xf32>
    %6 = tpu.matmul %4, %5, %cst {dimension_numbers = #tpu.dot_dimension_numbers<[1], [0], [0], [1], [0, 0, 1, 1], [], []>} : vector<8x512xbf16>, vector<512x256xbf16>, vector<8x256xf32> -> vector<8x256xf32>
    %7 = arith.addf %3, %6 : vector<8x256xf32>
    %c0_6 = arith.constant 0 : index
    %c0_7 = arith.constant 0 : index
    %8 = vector.load %arg7[%c0_6, %c0_7] : memref<8x256xf32, #tpu.memory_space<vmem>>, vector<8x256xf32>
    tpu.vector_store %arg7[%c0_6, %c0_7], %7 {strides = array<i32>} : memref<8x256xf32, #tpu.memory_space<vmem>>, vector<8x256xf32>,
    %c1_i32 = arith.constant 1 : i32
    %9 = arith.cmpi eq, %arg0, %c1_i32 : i32
    %10 = arith.extui %9 : i1 to i32
    %c0_i32_8 = arith.constant 0 : i32
    %11 = arith.cmpi ne, %10, %c0_i32_8 : i32
    scf.if %11 {
      %c0_i32_9 = arith.constant 0 : i32
      %12 = tpu.memref_slice %arg9[%c0_i32_9] : memref<1x!tpu.dma_semaphore, #tpu.memory_space<semaphore_mem>> -> memref<1x!tpu.dma_semaphore, #tpu.memory_space<semaphore_mem>>
      %13 = tpu.memref_squeeze %12 : memref<1x!tpu.dma_semaphore, #tpu.memory_space<semaphore_mem>> -> memref<!tpu.dma_semaphore, #tpu.memory_space<semaphore_mem>>
      tpu.wait_dma2 semaphore(%13 : memref<!tpu.dma_semaphore, #tpu.memory_space<semaphore_mem>>) src(%arg4 : memref<256x256xbf16, #tpu.memory_space<any>>) dst(%arg8 : memref<256x256xbf16, #tpu.memory_space<vmem>>)
      %c0_10 = arith.constant 0 : index
      %c0_11 = arith.constant 0 : index
      %14 = vector.load %arg7[%c0_10, %c0_11] : memref<8x256xf32, #tpu.memory_space<vmem>>, vector<8x256xf32>
      %c0_12 = arith.constant 0 : index
      %c0_13 = arith.constant 0 : index
      %15 = vector.load %arg3[%c0_12, %c0_13] : memref<1x256xf32, #tpu.memory_space<vmem>>, vector<1x256xf32>
      %16 = vector.broadcast %15 : vector<1x256xf32> to vector<8x256xf32>
      %17 = arith.addf %14, %16 : vector<8x256xf32>
      %cst_14 = arith.constant 0.000000e+00 : f32
      %18 = vector.broadcast %cst_14 : f32 to vector<8x256xf32>
      %19 = arith.maximumf %17, %18 : vector<8x256xf32>
      %20 = arith.truncf %19 : vector<8x256xf32> to vector<8x256xbf16>
      %c0_15 = arith.constant 0 : index
      %c0_16 = arith.constant 0 : index
      %21 = vector.load %arg8[%c0_15, %c0_16] : memref<256x256xbf16, #tpu.memory_space<vmem>>, vector<256x256xbf16>
      %cst_17 = arith.constant dense<0.000000e+00> : vector<8x256xf32>
      %22 = tpu.matmul %20, %21, %cst_17 {dimension_numbers = #tpu.dot_dimension_numbers<[1], [0], [0], [1], [0, 0, 1, 1], [], []>} : vector<8x256xbf16>, vector<256x256xbf16>, vector<8x256xf32> -> vector<8x256xf32>
      %c0_18 = arith.constant 0 : index
      %c0_19 = arith.constant 0 : index
      %23 = vector.load %arg5[%c0_18, %c0_19] : memref<1x256xf32, #tpu.memory_space<vmem>>, vector<1x256xf32>
      %24 = vector.broadcast %23 : vector<1x256xf32> to vector<8x256xf32>
      %25 = arith.addf %22, %24 : vector<8x256xf32>
      %c0_20 = arith.constant 0 : index
      %c0_21 = arith.constant 0 : index
      %26 = vector.load %arg6[%c0_20, %c0_21] : memref<8x256xf32, #tpu.memory_space<vmem>>, vector<8x256xf32>
      tpu.vector_store %arg6[%c0_20, %c0_21], %25 {strides = array<i32>} : memref<8x256xf32, #tpu.memory_space<vmem>>, vector<8x256xf32>,
    } else {
    }
    return
  }
  func.func @transform_0(%arg0: i32) -> (i32, i32) {
    %c0_i32 = arith.constant 0 : i32
    %c0_i32_0 = arith.constant 0 : i32
    return %c0_i32, %arg0 : i32, i32
  }
  func.func @transform_1(%arg0: i32) -> (i32, i32) {
    %c0_i32 = arith.constant 0 : i32
    %c0_i32_0 = arith.constant 0 : i32
    return %arg0, %c0_i32 : i32, i32
  }
  func.func @transform_2(%arg0: i32) -> (i32, i32) {
    %c0_i32 = arith.constant 0 : i32
    %c0_i32_0 = arith.constant 0 : i32
    %c0_i32_1 = arith.constant 0 : i32
    return %c0_i32, %c0_i32_0 : i32, i32
  }
  func.func @transform_4(%arg0: i32) -> (i32, i32) {
    %c0_i32 = arith.constant 0 : i32
    %c0_i32_0 = arith.constant 0 : i32
    %c0_i32_1 = arith.constant 0 : i32
    return %c0_i32, %c0_i32_0 : i32, i32
  }
  func.func @transform_5(%arg0: i32) -> (i32, i32) {
    %c0_i32 = arith.constant 0 : i32
    %c0_i32_0 = arith.constant 0 : i32
    %c0_i32_1 = arith.constant 0 : i32
    return %c0_i32, %c0_i32_0 : i32, i32
  }
}

</mosaic_0001>

<llo_original>
// kernel: tpu_custom_call.1
$region0: #{tpu_custom_call.1}
  #allocation0 [shape = 'u32[]', space=smem, size = 0x4, offset = 0x4, fixed_abs, tag = 'smem constant byte address 0x4 - core index']
  #allocation1 [shape = 'u32[144,128]{1,0:T(1,128)}', space=vmem, size = 0x12000, scoped, tag = 'internal scratch']
  #allocation2 [shape = 'f32[8,256]{1,0:T(8,128)}', space=vmem, size = 0x2000, scoped, tag = 'scratch operand']
  #allocation3 [shape = 'bf16[256,256]{1,0:T(16,128)(2,1)}', space=vmem, size = 0x20000, scoped, tag = 'scratch operand']
  #allocation4 [shape = 's32[1]{0}', space=sflag, size = 0x4, scoped, tag = 'scratch operand']
  #allocation11 [shape = 's32[]', space=sflag, size = 0x4, offset = 0, fixed_abs, tag = 'sflag constant byte address 0x0 - dummy sync flag']
  %s0 = inlined_call_operand.hbm [shape: bf16[8,1024], index: 0, kind: input, shape index: {}]
  %s1 = inlined_call_operand.hbm [shape: bf16[1024,256], index: 1, kind: input, shape index: {}]
  %s2 = inlined_call_operand.vmem [shape: f32[1,256], index: 2, kind: input, shape index: {}]
  %s3 = inlined_call_operand.hbm [shape: bf16[256,256], index: 3, kind: input, shape index: {}]
  %s4 = inlined_call_operand.vmem [shape: f32[1,256], index: 4, kind: input, shape index: {}]
  %s5 = inlined_call_operand.hbm [shape: f32[8,256], index: 5, kind: output, shape index: {}]
  %s6 = sld [smem:[#allocation0]]
  $region65: #{tpu_custom_call.1} parent=0
    _
  %s8 = ssub.s32 1, %s6
  %s9 = scalar_select 0, %s8, %s6
  $region1: #{tpu_custom_call.1} parent=0
    #allocation5 [shape = 'u8[16384]{0}', space=vmem, size = 0x4000, scoped, tag = 'input window, operand 0']
    #allocation6 [shape = 's32[2]{0}', space=sflag, size = 0x8, scoped, tag = 'scoped memory for tpu_custom_call.1']
    #allocation7 [shape = 's32[2]{0}', space=sflag, size = 0x8, scoped, tag = 'scoped memory for tpu_custom_call.1']
    #allocation8 [shape = 'u8[524288]{0}', space=vmem, size = 0x80000, scoped, tag = 'input window, operand 1']
    #allocation9 [shape = 's32[2]{0}', space=sflag, size = 0x8, scoped, tag = 'scoped memory for tpu_custom_call.1']
    #allocation10 [shape = 'u8[8192]{0}', space=vmem, size = 0x2000, scoped, tag = 'output window, operand 0, single buffered']
    %10 = vsyncpa [#allocation6], 0
    %s11 = scalar_lea.sflag [#allocation6], 1
    %12 = vsyncpa %s11, 0
    %13 = vsyncpa [#allocation9], 0
    %s14 = scalar_lea.sflag [#allocation9], 1
    %15 = vsyncpa %s14, 0
    %16 = vsyncpa [#allocation7], 0
    loop: start=0, step=1, limit=4
    $region2: #{tpu_custom_call.1} parent=1 // loop_pre_header
      _
    $region3: #{tpu_custom_call.1} parent=1 // loop_header
      %s18 = sphi 0, %s22
      %p19 = scmp.ge.s32.totalorder %s18, 4
      %s28 = sphi 0, %s30
      %s31 = sphi 0, %s28
      %s32 = sphi 0, %s31
      %s48 = sphi 0, %s32
      %s54 = sphi 0, %s56
      %s57 = sphi 0, %s54
      %s58 = sphi 0, %s57
      %s74 = sphi 0, %s58
      %s78 = sphi 0, %s78
      %s80 = sphi 0, %s78
      %s81 = sphi 0, %s80
      %s95 = sphi 0, %s81
      %s99 = sphi 0, %s99
      %s101 = sphi 0, %s99
      %s102 = sphi 0, %s101
      %s116 = sphi 0, %s102
      %s120 = sphi 0, %s120
      %s122 = sphi 0, %s120
      %s123 = sphi 0, %s122
      %s137 = sphi 0, %s123
    $region4: #{tpu_custom_call.1} parent=1 // loop_header_branch
      %21 = sbr.rel (%p19) target = $region8
    $region5: #{tpu_custom_call.1} parent=1 // loop_body
      %s23 = ssub.s32 %s18, 1
      %s24 = ssub.s32 %s18, 2
      %s25 = sadd.s32 %s18, 1
      %s26 = ssub.s32 %s18, %s25
      %p27 = scmp.eq.s32.totalorder %s26, 0
      %s29 = sadd.s32 %s28, 1
      %s30 = scalar_select %p27, %s28, %s29
      %p33 = pneg %p27
      %p34 = scmp.eq.s32.totalorder %s18, 1
      %p35 = por %p33, %p34
      %p36 = scmp.ne.s32.totalorder %s28, %s31
      %p37 = scmp.eq.s32.totalorder %s18, 0
      %p38 = por %p36, %p37
      %p39 = scmp.ne.s32.totalorder %s28, %s31
      %p40 = scmp.eq.s32.totalorder %s23, 1
      %p41 = por %p39, %p40
      %p42 = scmp.ne.s32.totalorder %s31, %s32
      %p43 = scmp.eq.s32.totalorder %s23, 0
      %p44 = por %p42, %p43
      %p45 = scmp.ne.s32.totalorder %s31, %s32
      %p46 = scmp.eq.s32.totalorder %s24, 1
      %p47 = por %p45, %p46
      %p49 = scmp.ne.s32.totalorder %s32, %s48
      %p50 = scmp.eq.s32.totalorder %s24, 0
      %p51 = por %p49, %p50
      %s52 = ssub.s32 %s18, %s25
      %p53 = scmp.eq.s32.totalorder %s52, 0
      %s55 = sadd.s32 %s54, 1
      %s56 = scalar_select %p53, %s54, %s55
      %p59 = pneg %p53
      %p60 = scmp.eq.s32.totalorder %s18, 1
      %p61 = por %p59, %p60
      %p62 = scmp.ne.s32.totalorder %s54, %s57
      %p63 = scmp.eq.s32.totalorder %s18, 0
      %p64 = por %p62, %p63
      %p65 = scmp.ne.s32.totalorder %s54, %s57
      %p66 = scmp.eq.s32.totalorder %s23, 1
      %p67 = por %p65, %p66
      %p68 = scmp.ne.s32.totalorder %s57, %s58
      %p69 = scmp.eq.s32.totalorder %s23, 0
      %p70 = por %p68, %p69
      %p71 = scmp.ne.s32.totalorder %s57, %s58
      %p72 = scmp.eq.s32.totalorder %s24, 1
      %p73 = por %p71, %p72
      %p75 = scmp.ne.s32.totalorder %s58, %s74
      %p76 = scmp.eq.s32.totalorder %s24, 0
      %p77 = por %p75, %p76
      %s79 = sadd.s32 %s78, 1
      %p82 = scmp.eq.s32.totalorder %s18, 1
      %p83 = scmp.ne.s32.totalorder %s78, %s80
      %p84 = scmp.eq.s32.totalorder %s18, 0
      %p85 = por %p83, %p84
      %p86 = scmp.ne.s32.totalorder %s78, %s80
      %p87 = scmp.eq.s32.totalorder %s23, 1
      %p88 = por %p86, %p87
      %p89 = scmp.ne.s32.totalorder %s80, %s81
      %p90 = scmp.eq.s32.totalorder %s23, 0
      %p91 = por %p89, %p90
      %p92 = scmp.ne.s32.totalorder %s80, %s81
      %p93 = scmp.eq.s32.totalorder %s24, 1
      %p94 = por %p92, %p93
      %p96 = scmp.ne.s32.totalorder %s81, %s95
      %p97 = scmp.eq.s32.totalorder %s24, 0
      %p98 = por %p96, %p97
      %s100 = sadd.s32 %s99, 1
      %p103 = scmp.eq.s32.totalorder %s18, 1
      %p104 = scmp.ne.s32.totalorder %s99, %s101
      %p105 = scmp.eq.s32.totalorder %s18, 0
      %p106 = por %p104, %p105
      %p107 = scmp.ne.s32.totalorder %s99, %s101
      %p108 = scmp.eq.s32.totalorder %s23, 1
      %p109 = por %p107, %p108
      %p110 = scmp.ne.s32.totalorder %s101, %s102
      %p111 = scmp.eq.s32.totalorder %s23, 0
      %p112 = por %p110, %p111
      %p113 = scmp.ne.s32.totalorder %s101, %s102
      %p114 = scmp.eq.s32.totalorder %s24, 1
      %p115 = por %p113, %p114
      %p117 = scmp.ne.s32.totalorder %s102, %s116
      %p118 = scmp.eq.s32.totalorder %s24, 0
      %p119 = por %p117, %p118
      %s121 = sadd.s32 %s120, 1
      %p124 = scmp.eq.s32.totalorder %s18, 1
      %p125 = scmp.ne.s32.totalorder %s120, %s122
      %p126 = scmp.eq.s32.totalorder %s18, 0
      %p127 = por %p125, %p126
      %p128 = scmp.ne.s32.totalorder %s120, %s122
      %p129 = scmp.eq.s32.totalorder %s23, 1
      %p130 = por %p128, %p129
      %p131 = scmp.ne.s32.totalorder %s122, %s123
      %p132 = scmp.eq.s32.totalorder %s23, 0
      %p133 = por %p131, %p132
      %p134 = scmp.ne.s32.totalorder %s122, %s123
      %p135 = scmp.eq.s32.totalorder %s24, 1
      %p136 = por %p134, %p135
      %p138 = scmp.ne.s32.totalorder %s123, %s137
      %p139 = scmp.eq.s32.totalorder %s24, 0
      %p140 = por %p138, %p139
      %p141 = scmp.le.s32.totalorder 1, %s18
      %p142 = scmp.lt.s32.totalorder %s18, 3
      %p143 = pnand %p141, %p142
      %p144 = pneg %p143
      // Predicated region
      $region9: #{tpu_custom_call.1} parent=5 // pred_check
        _
      $region10: #{tpu_custom_call.1} parent=5 // pred_check_branch
        %146 = sbr.rel (%p143) target = $region12
      $region11: #{tpu_custom_call.1} parent=5 // pred_region
        %s147 = ssub.s32 %s18, 1
        // Predicated region
        $region13: #{tpu_custom_call.1} parent=11 // pred_check
          %p148 = pneg %p91
        $region14: #{tpu_custom_call.1} parent=11 // pred_check_branch
          %150 = sbr.rel (%p148) target = $region16
        $region15: #{tpu_custom_call.1} parent=11 // pred_region
          _
        $region16: #{tpu_custom_call.1} parent=11 // pred_fallthru
          _
        // Predicated region
        $region17: #{tpu_custom_call.1} parent=11 // pred_check
          %p151 = pneg %p112
        $region18: #{tpu_custom_call.1} parent=11 // pred_check_branch
          %153 = sbr.rel (%p151) target = $region20
        $region19: #{tpu_custom_call.1} parent=11 // pred_region
          _
        $region20: #{tpu_custom_call.1} parent=11 // pred_fallthru
          _
      $region12: #{tpu_custom_call.1} parent=5 // pred_fallthru
        _
      %p154 = scmp.lt.s32.totalorder %s18, 2
      // Predicated region
      $region21: #{tpu_custom_call.1} parent=5 // pred_check
        %p155 = pneg %p154
      $region22: #{tpu_custom_call.1} parent=5 // pred_check_branch
        %157 = sbr.rel (%p155) target = $region24
      $region23: #{tpu_custom_call.1} parent=5 // pred_region
        // Predicated region
        $region25: #{tpu_custom_call.1} parent=23 // pred_check
          %p158 = pneg %p38
        $region26: #{tpu_custom_call.1} parent=23 // pred_check_branch
          %160 = sbr.rel (%p158) target = $region28
        $region27: #{tpu_custom_call.1} parent=23 // pred_region
          %s161 = sand.u32 %s28, 1
          %s162 = scalar_lea.sflag [#allocation6], %s161
          %s163 = sand.u32 %s28, 1
          %s164 = smul.addr %s163, 16
          %s165 = scalar_lea.vmem [#allocation5], %s164
          %s166 = smul.u32 4, %s18
          %s168 = ssub.s32 256, 256
          %169 = vsyncadd %s162, %s168
          %s170 = smul.addr %s166, 64
          %s171 = scalar_lea.hbm %s0, %s170
          %s173 = sshll.u32 %s165, 4
          %s174 = int_to_ptr.vmem [resolvable:$true] %s173
          %176 = dma.hbm_to_vmem [thread:$0]  %s171, 256, %s174, %s162
        $region28: #{tpu_custom_call.1} parent=23 // pred_fallthru
          _
        // Predicated region
        $region29: #{tpu_custom_call.1} parent=23 // pred_check
          %p177 = pneg %p64
        $region30: #{tpu_custom_call.1} parent=23 // pred_check_branch
          %179 = sbr.rel (%p177) target = $region32
        $region31: #{tpu_custom_call.1} parent=23 // pred_region
          %s180 = sand.u32 %s54, 1
          %s181 = scalar_lea.sflag [#allocation9], %s180
          %s182 = sand.u32 %s54, 1
          %s183 = smul.addr %s182, 512
          %s184 = scalar_lea.vmem [#allocation8], %s183
          %s185 = smul.u32 64, %s18
          %s187 = ssub.s32 8192, 8192
          %188 = vsyncadd %s181, %s187
          %s189 = smul.addr %s185, 2
          %s190 = smul.addr %s189, 64
          %s191 = scalar_lea.hbm %s1, %s190
          %s192 = sshll.u32 %s184, 4
          %s193 = int_to_ptr.vmem [resolvable:$true] %s192
          %198 = dma.hbm_to_vmem [thread:$0]  %s191, 8192, %s193, %s181, 128, 128, 8
        $region32: #{tpu_custom_call.1} parent=23 // pred_fallthru
          _
      $region24: #{tpu_custom_call.1} parent=5 // pred_fallthru
        _
      %p199 = scmp.le.s32.totalorder 1, %s18
      %p200 = scmp.lt.s32.totalorder %s18, 3
      %p201 = pnand %p199, %p200
      %p202 = pneg %p201
      // Predicated region
      $region33: #{tpu_custom_call.1} parent=5 // pred_check
        _
      $region34: #{tpu_custom_call.1} parent=5 // pred_check_branch
        %204 = sbr.rel (%p201) target = $region36
      $region35: #{tpu_custom_call.1} parent=5 // pred_region
        %s205 = ssub.s32 %s18, 1
        %s206 = sand.u32 %s31, 1
        %s207 = scalar_lea.sflag [#allocation6], %s206
        %s208 = sand.u32 %s31, 1
        %s209 = smul.addr %s208, 16
        %s210 = scalar_lea.vmem [#allocation5], %s209
        // Predicated region
        $region37: #{tpu_custom_call.1} parent=35 // pred_check
          %p211 = pneg %p44
        $region38: #{tpu_custom_call.1} parent=35 // pred_check_branch
          %213 = sbr.rel (%p211) target = $region40
        $region39: #{tpu_custom_call.1} parent=35 // pred_region
          %214 = dma.done %s207, 256
        $region40: #{tpu_custom_call.1} parent=35 // pred_fallthru
          _
        %s215 = sand.u32 %s57, 1
        %s216 = scalar_lea.sflag [#allocation9], %s215
        %s217 = sand.u32 %s57, 1
        %s218 = smul.addr %s217, 512
        %s219 = scalar_lea.vmem [#allocation8], %s218
        // Predicated region
        $region41: #{tpu_custom_call.1} parent=35 // pred_check
          %p220 = pneg %p70
        $region42: #{tpu_custom_call.1} parent=35 // pred_check_branch
          %222 = sbr.rel (%p220) target = $region44
        $region43: #{tpu_custom_call.1} parent=35 // pred_region
          %223 = dma.done %s216, 8192
        $region44: #{tpu_custom_call.1} parent=35 // pred_fallthru
          _
        %s224 = sand.u32 %s31, 1
        %s225 = scalar_lea.sflag [#allocation6], %s224
        %s226 = sand.u32 %s31, 1
        %s227 = smul.addr %s226, 16
        %s228 = scalar_lea.vmem [#allocation5], %s227
        %p229 = pneg %p44
        %p230 = pneg %p41
        %s231 = sand.u32 %s57, 1
        %s232 = scalar_lea.sflag [#allocation9], %s231
        %s233 = sand.u32 %s57, 1
        %s234 = smul.addr %s233, 512
        %s235 = scalar_lea.vmem [#allocation8], %s234
        %p236 = pneg %p70
        %p237 = pneg %p67
        %p238 = pneg %p91
        %p239 = pneg %p88
        %p240 = pneg %p112
        %p241 = pneg %p109
        %p242 = pneg %p133
        %p243 = pneg %p130
        %s244 = smul.u32 4, %s23
        %s245 = smul.u32 64, %s23
        %p246 = scmp.eq.s32.totalorder %s23, 0
        // Predicated region
        $region45: #{tpu_custom_call.1} parent=35 // pred_check
          %p247 = pneg %p246
        $region46: #{tpu_custom_call.1} parent=35 // pred_check_branch
          %249 = sbr.rel (%p247) target = $region48
        $region47: #{tpu_custom_call.1} parent=35 // pred_region
          #allocation12 [shape = 'u32[9]{0}', space=smem, size = 0x24, scoped, tag = 'DMA stride descriptor']
          %250 = vst [vmem:[#allocation2] sm:$0xff] 0.0
          %251 = vst [vmem:[#allocation2 + $0x8] sm:$0xff] 0.0
          %s253 = sshll.u32 1, 14
          %s254 = sxor.u32 4294967295, %s253
          %s256 = sld [smem:[#allocation0]]
          %s257 = sadd.s32 2, %s256
          %s259 = sshll.u32 7, 26
          %s260 = sxor.u32 4294967295, %s259
          %s261 = sand.u32 0, %s260
          %s262 = sshll.u32 %s257, 26
          %s263 = sor.u32 %s261, %s262
          %s264 = sshll.u32 [#allocation3], 4
          %s265 = int_to_ptr.vmem [resolvable:$true] %s264
          %268 = sst [smem:[#allocation12]] 256
          %s269 = scalar_lea.smem [#allocation12], 1
          %270 = sst [smem:[%s269]] 256
          %s271 = scalar_lea.smem [#allocation12], 2
          %272 = sst [smem:[%s271]] 2
          %s273 = scalar_lea.smem [#allocation12], 3
          %274 = sst [smem:[%s273]] 64
          %s275 = scalar_lea.smem [#allocation12], 4
          %276 = sst [smem:[%s275]] 128
          %s277 = scalar_lea.smem [#allocation12], 5
          %278 = sst [smem:[%s277]] 2
          %s279 = scalar_lea.smem [#allocation12], 6
          %280 = sst [smem:[%s279]] 128
          %s281 = scalar_lea.smem [#allocation12], 7
          %282 = sst [smem:[%s281]] 64
          %s283 = scalar_lea.smem [#allocation12], 8
          %284 = sst [smem:[%s283]] 4
          %286 = dma.general %s3, 4096, %s265, [#allocation4], [#allocation11], [#allocation12], %s263, 0
        $region48: #{tpu_custom_call.1} parent=35 // pred_fallthru
          _
        %v287 = vld [vmem:[#allocation2] sm:$0xff]
        %v288 = vld [vmem:[#allocation2 + $0x8] sm:$0xff]
        %v289 = vld [vmem:[%s210] sm:$0xff]
        %v290 = vld [vmem:[%s210 + $0x8] sm:$0xff]
        %v291 = vld [vmem:[%s219] sm:$0xff]
        %v292 = vld [vmem:[%s219 + $0x8] sm:$0xff]
        %v293 = vld [vmem:[%s219 + $0x10] sm:$0xff]
        %v294 = vld [vmem:[%s219 + $0x18] sm:$0xff]
        %v295 = vld [vmem:[%s219 + $0x20] sm:$0xff]
        %v296 = vld [vmem:[%s219 + $0x28] sm:$0xff]
        %v297 = vld [vmem:[%s219 + $0x30] sm:$0xff]
        %v298 = vld [vmem:[%s219 + $0x38] sm:$0xff]
        %v299 = vld [vmem:[%s219 + $0x40] sm:$0xff]
        %v300 = vld [vmem:[%s219 + $0x48] sm:$0xff]
        %v301 = vld [vmem:[%s219 + $0x50] sm:$0xff]
        %v302 = vld [vmem:[%s219 + $0x58] sm:$0xff]
        %v303 = vld [vmem:[%s219 + $0x60] sm:$0xff]
        %v304 = vld [vmem:[%s219 + $0x68] sm:$0xff]
        %v305 = vld [vmem:[%s219 + $0x70] sm:$0xff]
        %v306 = vld [vmem:[%s219 + $0x78] sm:$0xff]
        %v307 = vld [vmem:[%s219 + $0x80] sm:$0xff]
        %v308 = vld [vmem:[%s219 + $0x88] sm:$0xff]
        %v309 = vld [vmem:[%s219 + $0x90] sm:$0xff]
        %v310 = vld [vmem:[%s219 + $0x98] sm:$0xff]
        %v311 = vld [vmem:[%s219 + $0xa0] sm:$0xff]
        %v312 = vld [vmem:[%s219 + $0xa8] sm:$0xff]
        %v313 = vld [vmem:[%s219 + $0xb0] sm:$0xff]
        %v314 = vld [vmem:[%s219 + $0xb8] sm:$0xff]
        %v315 = vld [vmem:[%s219 + $0xc0] sm:$0xff]
        %v316 = vld [vmem:[%s219 + $0xc8] sm:$0xff]
        %v317 = vld [vmem:[%s219 + $0xd0] sm:$0xff]
        %v318 = vld [vmem:[%s219 + $0xd8] sm:$0xff]
        %v319 = vld [vmem:[%s219 + $0xe0] sm:$0xff]
        %v320 = vld [vmem:[%s219 + $0xe8] sm:$0xff]
        %v321 = vld [vmem:[%s219 + $0xf0] sm:$0xff]
        %v322 = vld [vmem:[%s219 + $0xf8] sm:$0xff]
        %v323 = vld [vmem:[%s219 + $0x100] sm:$0xff]
        %v324 = vld [vmem:[%s219 + $0x108] sm:$0xff]
        %v325 = vld [vmem:[%s219 + $0x110] sm:$0xff]
        %v326 = vld [vmem:[%s219 + $0x118] sm:$0xff]
        %v327 = vld [vmem:[%s219 + $0x120] sm:$0xff]
        %v328 = vld [vmem:[%s219 + $0x128] sm:$0xff]
        %v329 = vld [vmem:[%s219 + $0x130] sm:$0xff]
        %v330 = vld [vmem:[%s219 + $0x138] sm:$0xff]
        %v331 = vld [vmem:[%s219 + $0x140] sm:$0xff]
        %v332 = vld [vmem:[%s219 + $0x148] sm:$0xff]
        %v333 = vld [vmem:[%s219 + $0x150] sm:$0xff]
        %v334 = vld [vmem:[%s219 + $0x158] sm:$0xff]
        %v335 = vld [vmem:[%s219 + $0x160] sm:$0xff]
        %v336 = vld [vmem:[%s219 + $0x168] sm:$0xff]
        %v337 = vld [vmem:[%s219 + $0x170] sm:$0xff]
        %v338 = vld [vmem:[%s219 + $0x178] sm:$0xff]
        %v339 = vld [vmem:[%s219 + $0x180] sm:$0xff]
        %v340 = vld [vmem:[%s219 + $0x188] sm:$0xff]
        %v341 = vld [vmem:[%s219 + $0x190] sm:$0xff]
        %v342 = vld [vmem:[%s219 + $0x198] sm:$0xff]
        %v343 = vld [vmem:[%s219 + $0x1a0] sm:$0xff]
        %v344 = vld [vmem:[%s219 + $0x1a8] sm:$0xff]
        %v345 = vld [vmem:[%s219 + $0x1b0] sm:$0xff]
        %v346 = vld [vmem:[%s219 + $0x1b8] sm:$0xff]
        %v347 = vld [vmem:[%s219 + $0x1c0] sm:$0xff]
        %v348 = vld [vmem:[%s219 + $0x1c8] sm:$0xff]
        %v349 = vld [vmem:[%s219 + $0x1d0] sm:$0xff]
        %v350 = vld [vmem:[%s219 + $0x1d8] sm:$0xff]
        %v351 = vld [vmem:[%s219 + $0x1e0] sm:$0xff]
        %v352 = vld [vmem:[%s219 + $0x1e8] sm:$0xff]
        %v353 = vld [vmem:[%s219 + $0x1f0] sm:$0xff]
        %v354 = vld [vmem:[%s219 + $0x1f8] sm:$0xff]
        %v357 = vunpack.c.l.b16 %v289
        %v358 = vunpack.c.h.b16 %v289
        %v359 = vunpack.c.l.b16 %v290
        %v360 = vunpack.c.h.b16 %v290
        %v361 = vpack.c.b16 %v357, %v357
        %v362 = vpack.c.b16 %v358, %v358
        %v363 = vpack.c.b16 %v359, %v359
        %v364 = vpack.c.b16 %v360, %v360
        %v433 = vunpack.c.l.b16 %v291
        %v434 = vunpack.c.h.b16 %v291
        %v435 = vunpack.c.l.b16 %v292
        %v436 = vunpack.c.h.b16 %v292
        %v437 = vunpack.c.l.b16 %v293
        %v438 = vunpack.c.h.b16 %v293
        %v439 = vunpack.c.l.b16 %v294
        %v440 = vunpack.c.h.b16 %v294
        %v441 = vunpack.c.l.b16 %v295
        %v442 = vunpack.c.h.b16 %v295
        %v443 = vunpack.c.l.b16 %v296
        %v444 = vunpack.c.h.b16 %v296
        %v445 = vunpack.c.l.b16 %v297
        %v446 = vunpack.c.h.b16 %v297
        %v447 = vunpack.c.l.b16 %v298
        %v448 = vunpack.c.h.b16 %v298
        %v449 = vunpack.c.l.b16 %v299
        %v450 = vunpack.c.h.b16 %v299
        %v451 = vunpack.c.l.b16 %v300
        %v452 = vunpack.c.h.b16 %v300
        %v453 = vunpack.c.l.b16 %v301
        %v454 = vunpack.c.h.b16 %v301
        %v455 = vunpack.c.l.b16 %v302
        %v456 = vunpack.c.h.b16 %v302
        %v457 = vunpack.c.l.b16 %v303
        %v458 = vunpack.c.h.b16 %v303
        %v459 = vunpack.c.l.b16 %v304
        %v460 = vunpack.c.h.b16 %v304
        %v461 = vunpack.c.l.b16 %v305
        %v462 = vunpack.c.h.b16 %v305
        %v463 = vunpack.c.l.b16 %v306
        %v464 = vunpack.c.h.b16 %v306
        %v465 = vunpack.c.l.b16 %v307
        %v466 = vunpack.c.h.b16 %v307
        %v467 = vunpack.c.l.b16 %v308
        %v468 = vunpack.c.h.b16 %v308
        %v469 = vunpack.c.l.b16 %v309
        %v470 = vunpack.c.h.b16 %v309
        %v471 = vunpack.c.l.b16 %v310
        %v472 = vunpack.c.h.b16 %v310
        %v473 = vunpack.c.l.b16 %v311
        %v474 = vunpack.c.h.b16 %v311
        %v475 = vunpack.c.l.b16 %v312
        %v476 = vunpack.c.h.b16 %v312
        %v477 = vunpack.c.l.b16 %v313
        %v478 = vunpack.c.h.b16 %v313
        %v479 = vunpack.c.l.b16 %v314
        %v480 = vunpack.c.h.b16 %v314
        %v481 = vunpack.c.l.b16 %v315
        %v482 = vunpack.c.h.b16 %v315
        %v483 = vunpack.c.l.b16 %v316
        %v484 = vunpack.c.h.b16 %v316
        %v485 = vunpack.c.l.b16 %v317
        %v486 = vunpack.c.h.b16 %v317
        %v487 = vunpack.c.l.b16 %v318
        %v488 = vunpack.c.h.b16 %v318
        %v489 = vunpack.c.l.b16 %v319
        %v490 = vunpack.c.h.b16 %v319
        %v491 = vunpack.c.l.b16 %v320
        %v492 = vunpack.c.h.b16 %v320
        %v493 = vunpack.c.l.b16 %v321
        %v494 = vunpack.c.h.b16 %v321
        %v495 = vunpack.c.l.b16 %v322
        %v496 = vunpack.c.h.b16 %v322
        %v497 = vunpack.c.l.b16 %v323
        %v498 = vunpack.c.h.b16 %v323
        %v499 = vunpack.c.l.b16 %v324
        %v500 = vunpack.c.h.b16 %v324
        %v501 = vunpack.c.l.b16 %v325
        %v502 = vunpack.c.h.b16 %v325
        %v503 = vunpack.c.l.b16 %v326
        %v504 = vunpack.c.h.b16 %v326
        %v505 = vunpack.c.l.b16 %v327
        %v506 = vunpack.c.h.b16 %v327
        %v507 = vunpack.c.l.b16 %v328
        %v508 = vunpack.c.h.b16 %v328
        %v509 = vunpack.c.l.b16 %v329
        %v510 = vunpack.c.h.b16 %v329
        %v511 = vunpack.c.l.b16 %v330
        %v512 = vunpack.c.h.b16 %v330
        %v513 = vunpack.c.l.b16 %v331
        %v514 = vunpack.c.h.b16 %v331
        %v515 = vunpack.c.l.b16 %v332
        %v516 = vunpack.c.h.b16 %v332
        %v517 = vunpack.c.l.b16 %v333
        %v518 = vunpack.c.h.b16 %v333
        %v519 = vunpack.c.l.b16 %v334
        %v520 = vunpack.c.h.b16 %v334
        %v521 = vunpack.c.l.b16 %v335
        %v522 = vunpack.c.h.b16 %v335
        %v523 = vunpack.c.l.b16 %v336
        %v524 = vunpack.c.h.b16 %v336
        %v525 = vunpack.c.l.b16 %v337
        %v526 = vunpack.c.h.b16 %v337
        %v527 = vunpack.c.l.b16 %v338
        %v528 = vunpack.c.h.b16 %v338
        %v529 = vunpack.c.l.b16 %v339
        %v530 = vunpack.c.h.b16 %v339
        %v531 = vunpack.c.l.b16 %v340
        %v532 = vunpack.c.h.b16 %v340
        %v533 = vunpack.c.l.b16 %v341
        %v534 = vunpack.c.h.b16 %v341
        %v535 = vunpack.c.l.b16 %v342
        %v536 = vunpack.c.h.b16 %v342
        %v537 = vunpack.c.l.b16 %v343
        %v538 = vunpack.c.h.b16 %v343
        %v539 = vunpack.c.l.b16 %v344
        %v540 = vunpack.c.h.b16 %v344
        %v541 = vunpack.c.l.b16 %v345
        %v542 = vunpack.c.h.b16 %v345
        %v543 = vunpack.c.l.b16 %v346
        %v544 = vunpack.c.h.b16 %v346
        %v545 = vunpack.c.l.b16 %v347
        %v546 = vunpack.c.h.b16 %v347
        %v547 = vunpack.c.l.b16 %v348
        %v548 = vunpack.c.h.b16 %v348
        %v549 = vunpack.c.l.b16 %v349
        %v550 = vunpack.c.h.b16 %v349
        %v551 = vunpack.c.l.b16 %v350
        %v552 = vunpack.c.h.b16 %v350
        %v553 = vunpack.c.l.b16 %v351
        %v554 = vunpack.c.h.b16 %v351
        %v555 = vunpack.c.l.b16 %v352
        %v556 = vunpack.c.h.b16 %v352
        %v557 = vunpack.c.l.b16 %v353
        %v558 = vunpack.c.h.b16 %v353
        %v559 = vunpack.c.l.b16 %v354
        %v560 = vunpack.c.h.b16 %v354
        %v561 = vpack.c.b16 %v435, %v433
        %v562 = vpack.c.b16 %v436, %v434
        %v563 = vpack.c.b16 %v439, %v437
        %v564 = vpack.c.b16 %v440, %v438
        %v565 = vpack.c.b16 %v443, %v441
        %v566 = vpack.c.b16 %v444, %v442
        %v567 = vpack.c.b16 %v447, %v445
        %v568 = vpack.c.b16 %v448, %v446
        %v569 = vpack.c.b16 %v451, %v449
        %v570 = vpack.c.b16 %v452, %v450
        %v571 = vpack.c.b16 %v455, %v453
        %v572 = vpack.c.b16 %v456, %v454
        %v573 = vpack.c.b16 %v459, %v457
        %v574 = vpack.c.b16 %v460, %v458
        %v575 = vpack.c.b16 %v463, %v461
        %v576 = vpack.c.b16 %v464, %v462
        %v577 = vpack.c.b16 %v467, %v465
        %v578 = vpack.c.b16 %v468, %v466
        %v579 = vpack.c.b16 %v471, %v469
        %v580 = vpack.c.b16 %v472, %v470
        %v581 = vpack.c.b16 %v475, %v473
        %v582 = vpack.c.b16 %v476, %v474
        %v583 = vpack.c.b16 %v479, %v477
        %v584 = vpack.c.b16 %v480, %v478
        %v585 = vpack.c.b16 %v483, %v481
        %v586 = vpack.c.b16 %v484, %v482
        %v587 = vpack.c.b16 %v487, %v485
        %v588 = vpack.c.b16 %v488, %v486
        %v589 = vpack.c.b16 %v491, %v489
        %v590 = vpack.c.b16 %v492, %v490
        %v591 = vpack.c.b16 %v495, %v493
        %v592 = vpack.c.b16 %v496, %v494
        %v593 = vpack.c.b16 %v499, %v497
        %v594 = vpack.c.b16 %v500, %v498
        %v595 = vpack.c.b16 %v503, %v501
        %v596 = vpack.c.b16 %v504, %v502
        %v597 = vpack.c.b16 %v507, %v505
        %v598 = vpack.c.b16 %v508, %v506
        %v599 = vpack.c.b16 %v511, %v509
        %v600 = vpack.c.b16 %v512, %v510
        %v601 = vpack.c.b16 %v515, %v513
        %v602 = vpack.c.b16 %v516, %v514
        %v603 = vpack.c.b16 %v519, %v517
        %v604 = vpack.c.b16 %v520, %v518
        %v605 = vpack.c.b16 %v523, %v521
        %v606 = vpack.c.b16 %v524, %v522
        %v607 = vpack.c.b16 %v527, %v525
        %v608 = vpack.c.b16 %v528, %v526
        %v609 = vpack.c.b16 %v531, %v529
        %v610 = vpack.c.b16 %v532, %v530
        %v611 = vpack.c.b16 %v535, %v533
        %v612 = vpack.c.b16 %v536, %v534
        %v613 = vpack.c.b16 %v539, %v537
        %v614 = vpack.c.b16 %v540, %v538
        %v615 = vpack.c.b16 %v543, %v541
        %v616 = vpack.c.b16 %v544, %v542
        %v617 = vpack.c.b16 %v547, %v545
        %v618 = vpack.c.b16 %v548, %v546
        %v619 = vpack.c.b16 %v551, %v549
        %v620 = vpack.c.b16 %v552, %v550
        %v621 = vpack.c.b16 %v555, %v553
        %v622 = vpack.c.b16 %v556, %v554
        %v623 = vpack.c.b16 %v559, %v557
        %v624 = vpack.c.b16 %v560, %v558
        %689 = vmatprep.subr.bf16.mxu0 %v562
        %690 = vmatpush1.bf16.msra.mxu0 %v561
        %691 = vmatprep.subr.bf16.mxu0 %v564
        %692 = vmatpush1.bf16.msra.mxu0 %v563
        %693 = vmatprep.subr.bf16.mxu0 %v566
        %694 = vmatpush1.bf16.msra.mxu0 %v565
        %695 = vmatprep.subr.bf16.mxu0 %v568
        %696 = vmatpush1.bf16.msra.mxu0 %v567
        %697 = vmatprep.subr.bf16.mxu0 %v570
        %698 = vmatpush1.bf16.msra.mxu0 %v569
        %699 = vmatprep.subr.bf16.mxu0 %v572
        %700 = vmatpush1.bf16.msra.mxu0 %v571
        %701 = vmatprep.subr.bf16.mxu0 %v574
        %702 = vmatpush1.bf16.msra.mxu0 %v573
        %703 = vmatprep.subr.bf16.mxu0 %v576
        %704 = vmatpush1.bf16.msra.mxu0 %v575
        %705 = vmatprep.subr.bf16.mxu0 %v578
        %706 = vmatpush1.bf16.msra.mxu0 %v577
        %707 = vmatprep.subr.bf16.mxu0 %v580
        %708 = vmatpush1.bf16.msra.mxu0 %v579
        %709 = vmatprep.subr.bf16.mxu0 %v582
        %710 = vmatpush1.bf16.msra.mxu0 %v581
        %711 = vmatprep.subr.bf16.mxu0 %v584
        %712 = vmatpush1.bf16.msra.mxu0 %v583
        %713 = vmatprep.subr.bf16.mxu0 %v586
        %714 = vmatpush1.bf16.msra.mxu0 %v585
        %715 = vmatprep.subr.bf16.mxu0 %v588
        %716 = vmatpush1.bf16.msra.mxu0 %v587
        %717 = vmatprep.subr.bf16.mxu0 %v590
        %718 = vmatpush1.bf16.msra.mxu0 %v589
        %719 = vmatprep.subr.bf16.mxu0 %v592
        %720 = vmatpush1.bf16.msra.mxu0 %v591
        %721 = vmatprep.mubr.bf16.mxu0 %v362
        %722 = vmatmul.mubr.bf16.gmra.mrb[0].mxu0 %v361
        %v723 = vpop.f32.mrb[0].mxu0
        %v724 = vadd.f32 0.0, %v723
        %v725 = vpop.f32.mrb[0].mxu0
        %v726 = vadd.f32 0.0, %v725
        %v727 = vpop.f32.mrb[0].mxu0
        %v728 = vpop.f32.mrb[0].mxu0
        %729 = vdwg.mxu0
        %730 = vmatprep.subr.bf16.mxu0 %v594
        %731 = vmatpush1.bf16.msra.mxu0 %v593
        %732 = vmatprep.subr.bf16.mxu0 %v596
        %733 = vmatpush1.bf16.msra.mxu0 %v595
        %734 = vmatprep.subr.bf16.mxu0 %v598
        %735 = vmatpush1.bf16.msra.mxu0 %v597
        %736 = vmatprep.subr.bf16.mxu0 %v600
        %737 = vmatpush1.bf16.msra.mxu0 %v599
        %738 = vmatprep.subr.bf16.mxu0 %v602
        %739 = vmatpush1.bf16.msra.mxu0 %v601
        %740 = vmatprep.subr.bf16.mxu0 %v604
        %741 = vmatpush1.bf16.msra.mxu0 %v603
        %742 = vmatprep.subr.bf16.mxu0 %v606
        %743 = vmatpush1.bf16.msra.mxu0 %v605
        %744 = vmatprep.subr.bf16.mxu0 %v608
        %745 = vmatpush1.bf16.msra.mxu0 %v607
        %746 = vmatprep.subr.bf16.mxu0 %v610
        %747 = vmatpush1.bf16.msra.mxu0 %v609
        %748 = vmatprep.subr.bf16.mxu0 %v612
        %749 = vmatpush1.bf16.msra.mxu0 %v611
        %750 = vmatprep.subr.bf16.mxu0 %v614
        %751 = vmatpush1.bf16.msra.mxu0 %v613
        %752 = vmatprep.subr.bf16.mxu0 %v616
        %753 = vmatpush1.bf16.msra.mxu0 %v615
        %754 = vmatprep.subr.bf16.mxu0 %v618
        %755 = vmatpush1.bf16.msra.mxu0 %v617
        %756 = vmatprep.subr.bf16.mxu0 %v620
        %757 = vmatpush1.bf16.msra.mxu0 %v619
        %758 = vmatprep.subr.bf16.mxu0 %v622
        %759 = vmatpush1.bf16.msra.mxu0 %v621
        %760 = vmatprep.subr.bf16.mxu0 %v624
        %761 = vmatpush1.bf16.msra.mxu0 %v623
        %762 = vmatprep.mubr.bf16.mxu0 %v364
        %763 = vmatmul.mubr.bf16.gmra.mrb[0].mxu0 %v363
        %v764 = vpop.f32.mrb[0].mxu0
        %v765 = vadd.f32 %v724, %v764
        %v766 = vpop.f32.mrb[0].mxu0
        %v767 = vadd.f32 %v726, %v766
        %v768 = vpop.f32.mrb[0].mxu0
        %v769 = vpop.f32.mrb[0].mxu0
        %770 = vdwg.mxu0
        %v771 = vadd.f32 %v287, %v765
        %v772 = vadd.f32 %v288, %v767
        %773 = vst [vmem:[#allocation2] sm:$0xff] %v771
        %774 = vst [vmem:[#allocation2 + $0x8] sm:$0xff] %v772
        %p775 = scmp.eq.s32.totalorder %s23, 1
        // Predicated region
        $region49: #{tpu_custom_call.1} parent=35 // pred_check
          %p776 = pneg %p775
        $region50: #{tpu_custom_call.1} parent=35 // pred_check_branch
          %778 = sbr.rel (%p776) target = $region52
        $region51: #{tpu_custom_call.1} parent=35 // pred_region
          %s779 = smul.u32 4, 32
          %s780 = smul.u32 %s779, 2
          %s781 = sshll.u32 %s780, 4
          %782 = dma.done [#allocation4], %s781
          %v783 = vld [vmem:[#allocation2] sm:$0xff]
          %v784 = vld [vmem:[#allocation2 + $0x8] sm:$0xff]
          %v785 = vld [vmem:[%s2] sm:$0x3]
          %v787 = vlaneseq
          %v788 = vshrl.u32 %v787, 7
          %v789 = vsub.s32 0, %v788
          %v790 = vrot.slane %v785, %v789
          %v791 = vlaneseq
          %v792 = vshrl.u32 %v791, 7
          %v793 = vsub.s32 1, %v792
          %v794 = vrot.slane %v785, %v793
          %v797 = vadd.f32 %v783, %v790
          %v798 = vadd.f32 %v784, %v794
          %v799 = vmax.f32 %v797, 0.0
          %v800 = vmax.f32 %v798, 0.0
          %v801 = vpack.c.bf16 %v799, %v799
          %v802 = vpack.c.bf16 %v800, %v800
          %v803 = vld [vmem:[#allocation3] sm:$0xff]
          %v804 = vld [vmem:[#allocation3 + $0x8] sm:$0xff]
          %v805 = vld [vmem:[#allocation3 + $0x10] sm:$0xff]
          %v806 = vld [vmem:[#allocation3 + $0x18] sm:$0xff]
          %v807 = vld [vmem:[#allocation3 + $0x20] sm:$0xff]
          %v808 = vld [vmem:[#allocation3 + $0x28] sm:$0xff]
          %v809 = vld [vmem:[#allocation3 + $0x30] sm:$0xff]
          %v810 = vld [vmem:[#allocation3 + $0x38] sm:$0xff]
          %v811 = vld [vmem:[#allocation3 + $0x40] sm:$0xff]
          %v812 = vld [vmem:[#allocation3 + $0x48] sm:$0xff]
          %v813 = vld [vmem:[#allocation3 + $0x50] sm:$0xff]
          %v814 = vld [vmem:[#allocation3 + $0x58] sm:$0xff]
          %v815 = vld [vmem:[#allocation3 + $0x60] sm:$0xff]
          %v816 = vld [vmem:[#allocation3 + $0x68] sm:$0xff]
          %v817 = vld [vmem:[#allocation3 + $0x70] sm:$0xff]
          %v818 = vld [vmem:[#allocation3 + $0x78] sm:$0xff]
          %v819 = vld [vmem:[#allocation3 + $0x80] sm:$0xff]
          %v820 = vld [vmem:[#allocation3 + $0x88] sm:$0xff]
          %v821 = vld [vmem:[#allocation3 + $0x90] sm:$0xff]
          %v822 = vld [vmem:[#allocation3 + $0x98] sm:$0xff]
          %v823 = vld [vmem:[#allocation3 + $0xa0] sm:$0xff]
          %v824 = vld [vmem:[#allocation3 + $0xa8] sm:$0xff]
          %v825 = vld [vmem:[#allocation3 + $0xb0] sm:$0xff]
          %v826 = vld [vmem:[#allocation3 + $0xb8] sm:$0xff]
          %v827 = vld [vmem:[#allocation3 + $0xc0] sm:$0xff]
          %v828 = vld [vmem:[#allocation3 + $0xc8] sm:$0xff]
          %v829 = vld [vmem:[#allocation3 + $0xd0] sm:$0xff]
          %v830 = vld [vmem:[#allocation3 + $0xd8] sm:$0xff]
          %v831 = vld [vmem:[#allocation3 + $0xe0] sm:$0xff]
          %v832 = vld [vmem:[#allocation3 + $0xe8] sm:$0xff]
          %v833 = vld [vmem:[#allocation3 + $0xf0] sm:$0xff]
          %v834 = vld [vmem:[#allocation3 + $0xf8] sm:$0xff]
          %v835 = vld [vmem:[%s4] sm:$0x3]
          %v837 = vlaneseq
          %v838 = vshrl.u32 %v837, 7
          %v839 = vsub.s32 0, %v838
          %v840 = vrot.slane %v835, %v839
          %v841 = vlaneseq
          %v842 = vshrl.u32 %v841, 7
          %v843 = vsub.s32 1, %v842
          %v844 = vrot.slane %v835, %v843
          %847 = vmatprep.subr.bf16.mxu0 %v804
          %848 = vmatpush1.bf16.msra.mxu0 %v803
          %849 = vmatprep.subr.bf16.mxu0 %v806
          %850 = vmatpush1.bf16.msra.mxu0 %v805
          %851 = vmatprep.subr.bf16.mxu0 %v808
          %852 = vmatpush1.bf16.msra.mxu0 %v807
          %853 = vmatprep.subr.bf16.mxu0 %v810
          %854 = vmatpush1.bf16.msra.mxu0 %v809
          %855 = vmatprep.subr.bf16.mxu0 %v812
          %856 = vmatpush1.bf16.msra.mxu0 %v811
          %857 = vmatprep.subr.bf16.mxu0 %v814
          %858 = vmatpush1.bf16.msra.mxu0 %v813
          %859 = vmatprep.subr.bf16.mxu0 %v816
          %860 = vmatpush1.bf16.msra.mxu0 %v815
          %861 = vmatprep.subr.bf16.mxu0 %v818
          %862 = vmatpush1.bf16.msra.mxu0 %v817
          %863 = vmatprep.subr.bf16.mxu0 %v820
          %864 = vmatpush1.bf16.msra.mxu0 %v819
          %865 = vmatprep.subr.bf16.mxu0 %v822
          %866 = vmatpush1.bf16.msra.mxu0 %v821
          %867 = vmatprep.subr.bf16.mxu0 %v824
          %868 = vmatpush1.bf16.msra.mxu0 %v823
          %869 = vmatprep.subr.bf16.mxu0 %v826
          %870 = vmatpush1.bf16.msra.mxu0 %v825
          %871 = vmatprep.subr.bf16.mxu0 %v828
          %872 = vmatpush1.bf16.msra.mxu0 %v827
          %873 = vmatprep.subr.bf16.mxu0 %v830
          %874 = vmatpush1.bf16.msra.mxu0 %v829
          %875 = vmatprep.subr.bf16.mxu0 %v832
          %876 = vmatpush1.bf16.msra.mxu0 %v831
          %877 = vmatprep.subr.bf16.mxu0 %v834
          %878 = vmatpush1.bf16.msra.mxu0 %v833
          %879 = vmatprep.mubr.bf16.mxu0 %v802
          %880 = vmatmul.mubr.bf16.gmra.mrb[0].mxu0 %v801
          %v881 = vpop.f32.mrb[0].mxu0
          %v882 = vadd.f32 %v840, %v881
          %v883 = vpop.f32.mrb[0].mxu0
          %v884 = vadd.f32 %v844, %v883
          %v885 = vpop.f32.mrb[0].mxu0
          %v886 = vpop.f32.mrb[0].mxu0
          %887 = vdwg.mxu0
          %888 = vst [vmem:[#allocation10] sm:$0xff] %v882
          %889 = vst [vmem:[#allocation10 + $0x8] sm:$0xff] %v884
        $region52: #{tpu_custom_call.1} parent=35 // pred_fallthru
          _
        // Predicated region
        $region53: #{tpu_custom_call.1} parent=35 // pred_check
          %p890 = pneg %p130
        $region54: #{tpu_custom_call.1} parent=35 // pred_check_branch
          %892 = sbr.rel (%p890) target = $region56
        $region55: #{tpu_custom_call.1} parent=35 // pred_region
          %s894 = ssub.s32 256, 256
          %895 = vsyncadd [#allocation7], %s894
          %s897 = sshll.u32 [#allocation10], 4
          %s898 = int_to_ptr.vmem [resolvable:$true] %s897
          %900 = dma.vmem_to_hbm [thread:$0]  %s898, 256, %s5, [#allocation7]
        $region56: #{tpu_custom_call.1} parent=35 // pred_fallthru
          _
        // Predicated region
        $region57: #{tpu_custom_call.1} parent=35 // pred_check
          %p901 = pneg %p130
        $region58: #{tpu_custom_call.1} parent=35 // pred_check_branch
          %903 = sbr.rel (%p901) target = $region60
        $region59: #{tpu_custom_call.1} parent=35 // pred_region
          %904 = dma.done [#allocation7], 256
        $region60: #{tpu_custom_call.1} parent=35 // pred_fallthru
          _
      $region36: #{tpu_custom_call.1} parent=5 // pred_fallthru
        _
      %p905 = scmp.le.s32.totalorder 2, %s18
      // Predicated region
      $region61: #{tpu_custom_call.1} parent=5 // pred_check
        %p906 = pneg %p905
      $region62: #{tpu_custom_call.1} parent=5 // pred_check_branch
        %908 = sbr.rel (%p906) target = $region64
      $region63: #{tpu_custom_call.1} parent=5 // pred_region
        %s909 = ssub.s32 %s18, 2
      $region64: #{tpu_custom_call.1} parent=5 // pred_fallthru
        _
    $region6: #{tpu_custom_call.1} parent=1 // loop_footer
      %s22 = sadd.s32 1, %s18
    $region7: #{tpu_custom_call.1} parent=1 // loop_footer_branch
      %17 = sbr.rel target = $region3
    $region8: #{tpu_custom_call.1} parent=1 // loop_exit
      _
    %910 = vsyncpa [#allocation6], 1
    %s911 = scalar_lea.sflag [#allocation6], 1
    %912 = vsyncpa %s911, 1
    %913 = vsyncpa [#allocation9], 1
    %s914 = scalar_lea.sflag [#allocation9], 1
    %915 = vsyncpa %s914, 1
    %916 = vsyncpa [#allocation7], 1
    %s917 = scalar_lea.sflag [#allocation7], 1
    %918 = vsyncpa %s917, 1
  %919 = vsyncmov [#allocation4]
  %s920 = vpop.sfrf %919
  %p921 = scmp.eq.s32.totalorder %s920, 0
  %p922 = pneg %p921
  %924 = shalt.err (%p922)

</llo_original>
